<compile_context>
chip_gen: v7x
topology: tpu7x:2x2x1
jax: 0.10.0
libtpu: 0.0.40
codegen_flags: <defaults>
</compile_context>

<pallas_src>
import math

import jax
import jax.numpy as jnp
from jax.experimental import pallas as pl
from jax.experimental.pallas import tpu as pltpu


def _linear_sigmoid_kernel(x_ref, w_ref, b_ref, o_ref):
    """One streamed tile of rows.

    x_ref: (tile_rows, K) VMEM  -- streamed / double-buffered
    w_ref: (K, N)        VMEM  -- resident across grid steps (constant index_map)
    b_ref: (1, 1)        SMEM  -- scalar bias
    o_ref: (tile_rows, N) VMEM -- per-row logits -> sigmoid

    NN orientation: contraction dim K is minor on the lhs and major on the
    rhs, so the MXU consumes both operands without any XLU relayout.
    """
    logits = jnp.dot(x_ref[...], w_ref[...], preferred_element_type=jnp.float32)
    o_ref[...] = jax.nn.sigmoid(logits + b_ref[0, 0]).astype(o_ref.dtype)


def _vmem_limit_bytes():
    """Scoped-VMEM budget derived from the actual chip (v5e/v6e: 128 MiB,
    v7x: 64 MiB per TensorCore).  Leave half of physical VMEM as headroom."""
    cap = None
    try:
        cap = getattr(pltpu.get_tpu_info(), "vmem_capacity_bytes", None)
    except Exception:
        cap = None
    if not cap:
        cap = 64 << 20  # most conservative per-core capacity (v7x)
    return int(min(cap // 2, 64 << 20))


def perceptron_forward(x, w, b, *, block_b=None):
    """sigmoid(x @ w.T + b) squeezed to (B,).

    x: (B, D), w: (1, D) (nn.Linear convention), b: (1,). Returns (B,) f32.
    x streams in its own dtype (no wrapper cast); w/bias are tiny and cast
    to match.
    """
    B, D = x.shape
    assert w.shape == (1, D) and b.shape == (1,)

    itemsize = jnp.dtype(x.dtype).itemsize
    vmem_limit = _vmem_limit_bytes()
    # Per-buffer tile budget: big enough to amortize the ~0.35 us/step grid
    # overhead, small enough that the double-buffered input + weight + output
    # stay well inside the scoped limit on every generation.
    tile_bytes = min(12 << 20, vmem_limit // 4)

    # ---- choose streaming layout -------------------------------------------
    g = 128 // D if (D < 128 and 128 % D == 0) else 1
    use_packed = (g > 1) and (B % g == 0)

    if use_packed:
        # Lane-dense packing for small D: (B, D) -> (B/g, 128) is a
        # layout-preserving (free) reshape of contiguous row-major data.
        rows = B // g
        xs = x.reshape(rows, 128)
        # Block-diagonal weight (128, g): column j holds w in lanes j*D..(j+1)*D.
        ws = jnp.kron(jnp.eye(g, dtype=jnp.float32),
                      w.reshape(D, 1).astype(jnp.float32)).astype(x.dtype)
        out_cols = g
    else:
        rows = B
        xs = x
        ws = w.reshape(D, 1).astype(x.dtype)   # (D, 1) column -> NN matmul
        out_cols = 1

    k_dim = xs.shape[1]
    row_bytes = k_dim * itemsize

    # ---- tile rows: sized purely by bytes, no artificial row cap ------------
    if block_b is not None:
        tile_rows = max(1, block_b // g) if use_packed else block_b
    else:
        tile_rows = max(1, tile_bytes // max(1, row_bytes))
    if tile_rows >= rows:
        tile_rows = rows                      # single full block is allowed
    else:
        tile_rows = max(8, (tile_rows // 8) * 8)

    grid = (pl.cdiv(rows, tile_rows),)        # edge block instead of jnp.pad

    b_smem = b.reshape(1, 1).astype(jnp.float32)

    out = pl.pallas_call(
        _linear_sigmoid_kernel,
        out_shape=jax.ShapeDtypeStruct((rows, out_cols), jnp.float32),
        grid=grid,
        in_specs=[
            pl.BlockSpec((tile_rows, k_dim), lambda i: (i, 0)),   # x: streamed
            pl.BlockSpec((k_dim, out_cols), lambda i: (0, 0)),    # w: resident
            pl.BlockSpec(memory_space=pltpu.MemorySpace.SMEM),    # bias scalar
        ],
        out_specs=pl.BlockSpec((tile_rows, out_cols), lambda i: (i, 0)),
        compiler_params=pltpu.CompilerParams(
            dimension_semantics=("parallel",),
            vmem_limit_bytes=vmem_limit),
    )(xs, ws, b_smem)

    # rows * out_cols == B in both paths; the reshape is free (row-major order
    # of (B/g, g) / (B, 1) matches (B,)).
    # TODO(synk): for batch==1 torch .squeeze() returns a 0-d scalar; we keep (1,).
    return out.reshape(B)


if __name__ == "__main__":
    # Deterministic setup consistent with the module: batch=8, input_dim=32.
    batch, input_dim = 8, 32

    key = jax.random.PRNGKey(0)
    kx, kw, kb = jax.random.split(key, 3)

    x = jax.random.normal(kx, (batch, input_dim), dtype=jnp.float32)
    bound = 1.0 / math.sqrt(input_dim)
    w = jax.random.uniform(kw, (1, input_dim), minval=-bound, maxval=bound,
                           dtype=jnp.float32)
    b = jax.random.uniform(kb, (1,), minval=-bound, maxval=bound,
                           dtype=jnp.float32)

    def ref(xx, ww, bb):
        return jax.nn.sigmoid(xx.astype(jnp.float32) @ ww.T + bb).reshape(-1)

    # 1) packed lane-dense path (D=32 -> g=4), single block.
    y = perceptron_forward(x, w, b)
    jax.block_until_ready(y)
    assert y.shape == (batch,)
    assert jnp.allclose(y, ref(x, w, b), atol=1e-5, rtol=1e-5)

    # 2) packed path, multi-tile grid with a partial edge block (no padding):
    #    B=1000, block_b=512 -> packed tiles of 128 rows, grid=2, edge=122.
    b2 = 1000
    x2 = jax.random.normal(jax.random.PRNGKey(1), (b2, input_dim),
                           dtype=jnp.float32)
    y2 = perceptron_forward(x2, w, b, block_b=512)
    jax.block_until_ready(y2)
    assert y2.shape == (b2,)
    assert jnp.allclose(y2, ref(x2, w, b), atol=1e-5, rtol=1e-5)

    # 3) general path (D >= 128), multi-tile with edge block: B=300, block=128.
    d3, b3 = 256, 300
    k3 = jax.random.PRNGKey(2)
    x3 = jax.random.normal(jax.random.fold_in(k3, 0), (b3, d3), dtype=jnp.float32)
    bound3 = 1.0 / math.sqrt(d3)
    w3 = jax.random.uniform(jax.random.fold_in(k3, 1), (1, d3),
                            minval=-bound3, maxval=bound3, dtype=jnp.float32)
    b3v = jax.random.uniform(jax.random.fold_in(k3, 2), (1,),
                             minval=-bound3, maxval=bound3, dtype=jnp.float32)
    y3 = perceptron_forward(x3, w3, b3v, block_b=128)
    jax.block_until_ready(y3)
    assert y3.shape == (b3,)
    assert jnp.allclose(y3, ref(x3, w3, b3v), atol=1e-5, rtol=1e-5)

    # 4) fallback (small D but B % g != 0): general path, still exact.
    x4 = jax.random.normal(jax.random.PRNGKey(3), (10, input_dim),
                           dtype=jnp.float32)
    y4 = perceptron_forward(x4, w, b)
    jax.block_until_ready(y4)
    assert y4.shape == (10,)
    assert jnp.allclose(y4, ref(x4, w, b), atol=1e-5, rtol=1e-5)

    # 5) narrow streaming when the producer already emits bf16 (no wrapper
    #    cast of x; weight is cast to match, f32 accumulation + f32 sigmoid).
    x_bf16 = x.astype(jnp.bfloat16)
    y5 = perceptron_forward(x_bf16, w, b)
    jax.block_until_ready(y5)
    assert jnp.allclose(y5, ref(x, w, b), atol=3e-2, rtol=3e-2)

    print("KERNEL_OK")
</pallas_src>

<mosaic_0001>
module attributes {stable_mosaic.version = 11 : i64} {
  func.func @_linear_sigmoid_kernel(%arg0: i32, %arg1: memref<2x128xf32, #tpu.memory_space<vmem>>, %arg2: memref<128x4xf32, #tpu.memory_space<vmem>>, %arg3: memref<1x1xf32, #tpu.memory_space<smem>>, %arg4: memref<2x4xf32, #tpu.memory_space<vmem>>) attributes {dimension_semantics = [#tpu.dimension_semantics<parallel>], iteration_bounds = array<i64: 1>, scalar_prefetch = 0 : i64, scratch_operands = 0 : i64, tpu.core_type = #tpu.core_type<tc>, window_params = [{transform_indices = @transform_0, window_bounds = array<i64: 2, 128>}, {pipeline_mode = #tpu.pipeline_mode<synchronous>, transform_indices = @transform_1, window_bounds = array<i64: 128, 4>}, {transform_indices = @transform_2, window_bounds = array<i64: 1, 1>}, {transform_indices = @transform_3, window_bounds = array<i64: 2, 4>}]} {
    %c0 = arith.constant 0 : index
    %c0_0 = arith.constant 0 : index
    %0 = vector.load %arg1[%c0, %c0_0] : memref<2x128xf32, #tpu.memory_space<vmem>>, vector<2x128xf32>
    %c0_1 = arith.constant 0 : index
    %c0_2 = arith.constant 0 : index
    %1 = vector.load %arg2[%c0_1, %c0_2] : memref<128x4xf32, #tpu.memory_space<vmem>>, vector<128x4xf32>
    %cst = arith.constant dense<0.000000e+00> : vector<2x4xf32>
    %2 = tpu.matmul %0, %1, %cst {dimension_numbers = #tpu.dot_dimension_numbers<[1], [0], [0], [1], [0, 0, 1, 1], [], []>} : vector<2x128xf32>, vector<128x4xf32>, vector<2x4xf32> -> vector<2x4xf32>
    %c0_3 = arith.constant 0 : index
    %c0_4 = arith.constant 0 : index
    %3 = memref.load %arg3[%c0_3, %c0_4] : memref<1x1xf32, #tpu.memory_space<smem>>
    %4 = vector.broadcast %3 : f32 to vector<2x4xf32>
    %5 = arith.addf %2, %4 : vector<2x4xf32>
    %6 = arith.negf %5 : vector<2x4xf32>
    %7 = math.exp %6 : vector<2x4xf32>
    %cst_5 = arith.constant 1.000000e+00 : f32
    %8 = vector.broadcast %cst_5 : f32 to vector<2x4xf32>
    %9 = arith.addf %8, %7 : vector<2x4xf32>
    %10 = arith.divf %8, %9 : vector<2x4xf32>
    %c0_6 = arith.constant 0 : index
    %c0_7 = arith.constant 0 : index
    %11 = vector.load %arg4[%c0_6, %c0_7] : memref<2x4xf32, #tpu.memory_space<vmem>>, vector<2x4xf32>
    tpu.vector_store %arg4[%c0_6, %c0_7], %10 {strides = array<i32>} : memref<2x4xf32, #tpu.memory_space<vmem>>, vector<2x4xf32>,
    return
  }
  func.func @transform_0(%arg0: i32) -> (i32, i32) {
    %c0_i32 = arith.constant 0 : i32
    %c0_i32_0 = arith.constant 0 : i32
    return %arg0, %c0_i32 : i32, i32
  }
  func.func @transform_1(%arg0: i32) -> (i32, i32) {
    %c0_i32 = arith.constant 0 : i32
    %c0_i32_0 = arith.constant 0 : i32
    %c0_i32_1 = arith.constant 0 : i32
    return %c0_i32, %c0_i32_0 : i32, i32
  }
  func.func @transform_2(%arg0: i32) -> (i32, i32) {
    %c0_i32 = arith.constant 0 : i32
    %c0_i32_0 = arith.constant 0 : i32
    %c0_i32_1 = arith.constant 0 : i32
    return %c0_i32, %c0_i32_0 : i32, i32
  }
  func.func @transform_3(%arg0: i32) -> (i32, i32) {
    %c0_i32 = arith.constant 0 : i32
    %c0_i32_0 = arith.constant 0 : i32
    return %arg0, %c0_i32 : i32, i32
  }
}

</mosaic_0001>

<llo_original>
// kernel: tpu_custom_call.1
$region0: #{tpu_custom_call.1}
  #allocation0 [shape = 'u32[]', space=smem, size = 0x4, offset = 0x4, fixed_abs, tag = 'smem constant byte address 0x4 - core index']
  #allocation1 [shape = 'u32[144,128]{1,0:T(1,128)}', space=vmem, size = 0x12000, scoped, tag = 'internal scratch']
  #allocation2 [shape = 'f32[1,1]{1,0:T(1,128)S(6)}', space=smem, size = 0x200, scoped, tag = 'scoped memory for tpu_custom_call.1']
  %s0 = inlined_call_operand.vmem [shape: f32[2,128], index: 0, kind: input, shape index: {}]
  %s1 = inlined_call_operand.vmem [shape: f32[128,4], index: 1, kind: input, shape index: {}]
  %s2 = inlined_call_operand.<no memory space> [shape: f32[1,1], index: 2, kind: input, shape index: {}]
  %s3 = inlined_call_operand.hbm [shape: f32[2,4], index: 3, kind: output, shape index: {}]
  %s4 = sld [smem:[#allocation0]]
  $region22: #{tpu_custom_call.1} parent=0
    _
  %s6 = ssub.s32 1, %s4
  %s7 = scalar_select 0, %s6, %s4
  %8 = sst [smem:[#allocation2]] %s2
  $region1: #{tpu_custom_call.1} parent=0
    #allocation3 [shape = 'u8[1024]{0}', space=vmem, size = 0x400, scoped, tag = 'output window, operand 0, single buffered']
    #allocation4 [shape = 's32[1]{0}', space=sflag, size = 0x4, scoped, tag = 'scoped memory for tpu_custom_call.1']
    %9 = vsyncpa [#allocation4], 0
    // Predicated region
    $region2: #{tpu_custom_call.1} parent=1 // pred_check
      _
    $region3: #{tpu_custom_call.1} parent=1 // pred_check_branch
      %11 = sbr.rel (0) target = $region5
    $region4: #{tpu_custom_call.1} parent=1 // pred_region
      _
    $region5: #{tpu_custom_call.1} parent=1 // pred_fallthru
      _
    // Predicated region
    $region6: #{tpu_custom_call.1} parent=1 // pred_check
      _
    $region7: #{tpu_custom_call.1} parent=1 // pred_check_branch
      %13 = sbr.rel (0) target = $region9
    $region8: #{tpu_custom_call.1} parent=1 // pred_region
      _
    $region9: #{tpu_custom_call.1} parent=1 // pred_fallthru
      _
    // Predicated region
    $region10: #{tpu_custom_call.1} parent=1 // pred_check
      _
    $region11: #{tpu_custom_call.1} parent=1 // pred_check_branch
      %15 = sbr.rel (0) target = $region13
    $region12: #{tpu_custom_call.1} parent=1 // pred_region
      _
    $region13: #{tpu_custom_call.1} parent=1 // pred_fallthru
      _
    %v16 = vld [vmem:[%s0] sm:$0x3]
    %v17 = vld [vmem:[%s1] sm:$0xff]
    %v18 = vld [vmem:[%s1 + $0x8] sm:$0xff]
    %v19 = vld [vmem:[%s1 + $0x10] sm:$0xff]
    %v20 = vld [vmem:[%s1 + $0x18] sm:$0xff]
    %v21 = vld [vmem:[%s1 + $0x20] sm:$0xff]
    %v22 = vld [vmem:[%s1 + $0x28] sm:$0xff]
    %v23 = vld [vmem:[%s1 + $0x30] sm:$0xff]
    %v24 = vld [vmem:[%s1 + $0x38] sm:$0xff]
    %v25 = vld [vmem:[%s1 + $0x40] sm:$0xff]
    %v26 = vld [vmem:[%s1 + $0x48] sm:$0xff]
    %v27 = vld [vmem:[%s1 + $0x50] sm:$0xff]
    %v28 = vld [vmem:[%s1 + $0x58] sm:$0xff]
    %v29 = vld [vmem:[%s1 + $0x60] sm:$0xff]
    %v30 = vld [vmem:[%s1 + $0x68] sm:$0xff]
    %v31 = vld [vmem:[%s1 + $0x70] sm:$0xff]
    %v32 = vld [vmem:[%s1 + $0x78] sm:$0xff]
    %s33 = sld [smem:[#allocation2]]
    %v34 = vstv %s33
    %35 = vmatprep.subr.mxu0 0.0
    %36 = vmatpush1.msra.mxu0 %v17
    %37 = vmatprep.subr.mxu0 0.0
    %38 = vmatpush1.msra.mxu0 %v18
    %39 = vmatprep.subr.mxu0 0.0
    %40 = vmatpush1.msra.mxu0 %v19
    %41 = vmatprep.subr.mxu0 0.0
    %42 = vmatpush1.msra.mxu0 %v20
    %43 = vmatprep.subr.mxu0 0.0
    %44 = vmatpush1.msra.mxu0 %v21
    %45 = vmatprep.subr.mxu0 0.0
    %46 = vmatpush1.msra.mxu0 %v22
    %47 = vmatprep.subr.mxu0 0.0
    %48 = vmatpush1.msra.mxu0 %v23
    %49 = vmatprep.subr.mxu0 0.0
    %50 = vmatpush1.msra.mxu0 %v24
    %51 = vmatprep.subr.mxu0 0.0
    %52 = vmatpush1.msra.mxu0 %v25
    %53 = vmatprep.subr.mxu0 0.0
    %54 = vmatpush1.msra.mxu0 %v26
    %55 = vmatprep.subr.mxu0 0.0
    %56 = vmatpush1.msra.mxu0 %v27
    %57 = vmatprep.subr.mxu0 0.0
    %58 = vmatpush1.msra.mxu0 %v28
    %59 = vmatprep.subr.mxu0 0.0
    %60 = vmatpush1.msra.mxu0 %v29
    %61 = vmatprep.subr.mxu0 0.0
    %62 = vmatpush1.msra.mxu0 %v30
    %63 = vmatprep.subr.mxu0 0.0
    %64 = vmatpush1.msra.mxu0 %v31
    %65 = vmatprep.subr.mxu0 0.0
    %66 = vmatpush1.msra.mxu0 %v32
    %67 = vmatprep.subr.mxu0 0.0
    %68 = vmatpush1.msra.mxu0 0.0
    %69 = vmatprep.subr.mxu0 0.0
    %70 = vmatpush1.msra.mxu0 0.0
    %71 = vmatprep.subr.mxu0 0.0
    %72 = vmatpush1.msra.mxu0 0.0
    %73 = vmatprep.subr.mxu0 0.0
    %74 = vmatpush1.msra.mxu0 0.0
    %75 = vmatprep.subr.mxu0 0.0
    %76 = vmatpush1.msra.mxu0 0.0
    %77 = vmatprep.subr.mxu0 0.0
    %78 = vmatpush1.msra.mxu0 0.0
    %79 = vmatprep.subr.mxu0 0.0
    %80 = vmatpush1.msra.mxu0 0.0
    %81 = vmatprep.subr.mxu0 0.0
    %82 = vmatpush1.msra.mxu0 0.0
    %83 = vmatprep.subr.mxu0 0.0
    %84 = vmatpush1.msra.mxu0 0.0
    %85 = vmatprep.subr.mxu0 0.0
    %86 = vmatpush1.msra.mxu0 0.0
    %87 = vmatprep.subr.mxu0 0.0
    %88 = vmatpush1.msra.mxu0 0.0
    %89 = vmatprep.subr.mxu0 0.0
    %90 = vmatpush1.msra.mxu0 0.0
    %91 = vmatprep.subr.mxu0 0.0
    %92 = vmatpush1.msra.mxu0 0.0
    %93 = vmatprep.subr.mxu0 0.0
    %94 = vmatpush1.msra.mxu0 0.0
    %95 = vmatprep.subr.mxu0 0.0
    %96 = vmatpush1.msra.mxu0 0.0
    %97 = vmatprep.subr.mxu0 0.0
    %98 = vmatpush1.msra.mxu0 0.0
    %99 = vmatprep.mubr.f32.mxu0 0.0
    %100 = vmatmul.mubr.f32.gmra.mrb[0].mxu0 %v16
    %v101 = vpop.f32.mrb[0].mxu0
    %v102 = vadd.f32 %v34, %v101
    %v103 = vpop.f32.mrb[0].mxu0
    %104 = vdwg.mxu0
    %v105 = vxor.u32 %v102, 2147483648
    %v106 = vmul.f32 %v105, 1.442695
    %v107 = vpow.pop %v106
    %v108 = vadd.f32 %v107, 1.0
    %v109 = vrcp.pop %v108
    %v110 = vmul.f32 1.0, %v109
    %vm111 = vcmask 25600
    %112 = vst.msk [vmem:[#allocation3] sm:$0x3] %vm111, %v110
    // Predicated region
    $region14: #{tpu_custom_call.1} parent=1 // pred_check
      _
    $region15: #{tpu_custom_call.1} parent=1 // pred_check_branch
      %114 = sbr.rel (0) target = $region17
    $region16: #{tpu_custom_call.1} parent=1 // pred_region
      %s116 = ssub.s32 32, 32
      %117 = vsyncadd [#allocation4], %s116
      %s119 = sshll.u32 [#allocation3], 4
      %s120 = int_to_ptr.vmem [resolvable:$true] %s119
      %122 = dma.vmem_to_hbm [thread:$0]  %s120, 32, %s3, [#allocation4]
    $region17: #{tpu_custom_call.1} parent=1 // pred_fallthru
      _
    // Predicated region
    $region18: #{tpu_custom_call.1} parent=1 // pred_check
      _
    $region19: #{tpu_custom_call.1} parent=1 // pred_check_branch
      %124 = sbr.rel (0) target = $region21
    $region20: #{tpu_custom_call.1} parent=1 // pred_region
      %125 = dma.done [#allocation4], 32
    $region21: #{tpu_custom_call.1} parent=1 // pred_fallthru
      _
    %126 = vsyncpa [#allocation4], 1

</llo_original>
